<compile_context>
chip_gen: v7x
topology: tpu7x:2x2x1
jax: 0.10.0
libtpu: 0.0.40
codegen_flags: <defaults>
</compile_context>

<pallas_src>
import functools

import jax
import jax.numpy as jnp
from jax import lax
from jax.experimental import pallas as pl
from jax.experimental.pallas import tpu as pltpu


# ---------------------------------------------------------------------------
# Hardware-aware policy helpers
# ---------------------------------------------------------------------------
def _vmem_limit_bytes():
    """~80% of physical VMEM (51 MiB on v7x, 102 MiB on v5e/v6e), capped at 110 MiB."""
    try:
        cap = int(pltpu.get_tpu_info().vmem_capacity_bytes)
    except Exception:
        return 64 * 1024 * 1024
    return min(int(cap * 0.8), 110 * 1024 * 1024)


def _tile_prefs():
    try:
        kind = jax.devices()[0].device_kind.lower()
    except Exception:
        kind = ""
    if "v5 lite" in kind or "v5e" in kind or "v5lite" in kind:
        # 4x128x128 MXU, single vst slot, no bf16 VPU/EUP: 128-row tiles, f32 exp.
        return {"tq": 128, "tk": 256, "rows": 128, "bf16_exp": False}
    if "v6" in kind:
        # 128 MiB VMEM, ~640 FLOP/B roofline: big q tiles pay; tk=256 keeps the
        # (tq, tk) f32 score tile from spilling the vreg file.
        return {"tq": 512, "tk": 256, "rows": 256, "bf16_exp": True}
    if "v7" in kind:
        # 64 MiB VMEM, 3.2 TB/s HBM: tq=256 already clears the roofline.
        return {"tq": 256, "tk": 256, "rows": 256, "bf16_exp": True}
    return {"tq": 256, "tk": 256, "rows": 256, "bf16_exp": False}


def _pick_tile(n, preferred):
    """Largest tile <= preferred that divides n and keeps sublane (8) alignment."""
    if n <= preferred:
        return n
    for t in range(preferred, 7, -1):
        if n % t == 0 and t % 8 == 0:
            return t
    # TODO(synk): pad + mask instead of one full-size block for long odd lengths.
    return n


def _resident_spec(block_shape, index_map, array):
    """Spec for a constant-index (VMEM-resident) block.

    Large resident blocks are single-buffered (pl.Buffered(1)) so the unused
    second pipeline buffer does not double their VMEM footprint (important for
    the full projection weights on v7x's 64 MiB VMEM); tiny blocks keep the
    default pipelining.
    """
    nbytes = array.size * array.dtype.itemsize
    if nbytes >= (1 << 20):
        try:
            return pl.BlockSpec(block_shape, index_map, pipeline_mode=pl.Buffered(1))
        except TypeError:  # older jax without pipeline_mode
            pass
    return pl.BlockSpec(block_shape, index_map)


# ---------------------------------------------------------------------------
# Kernel 1: head-major projection  y[h] = x @ W[h] + b[h]  -> (heads, rows, d_k)
# ---------------------------------------------------------------------------
def _head_proj_kernel(x_ref, w_ref, b_ref, o_ref):
    h = pl.program_id(1)
    acc = jnp.dot(x_ref[...], w_ref[h], preferred_element_type=jnp.float32)
    o_ref[...] = (acc + b_ref[h]).astype(o_ref.dtype)


def _head_projection(x2d, w_hm, b_hm, out_dtype, row_tile, vmem_limit):
    rows, d_model = x2d.shape
    heads, _, d_k = w_hm.shape
    return pl.pallas_call(
        _head_proj_kernel,
        out_shape=jax.ShapeDtypeStruct((heads, rows, d_k), out_dtype),
        grid_spec=pltpu.PrefetchScalarGridSpec(
            num_scalar_prefetch=0,
            grid=(rows // row_tile, heads),
            in_specs=[
                # Activation tile: constant across the inner head axis, so it is
                # fetched once per row tile (no re-DMA per head).
                pl.BlockSpec((row_tile, d_model), lambda i, h: (i, 0)),
                # Full head-major weight/bias resident in VMEM (read once).
                _resident_spec((heads, d_model, d_k), lambda i, h: (0, 0, 0), w_hm),
                _resident_spec((heads, 1, d_k), lambda i, h: (0, 0, 0), b_hm),
            ],
            out_specs=pl.BlockSpec((pl.Squeezed(), row_tile, d_k),
                                   lambda i, h: (h, i, 0)),
        ),
        compiler_params=pltpu.CompilerParams(
            dimension_semantics=("parallel", "parallel"),
            vmem_limit_bytes=vmem_limit),
    )(x2d, w_hm, b_hm)


# ---------------------------------------------------------------------------
# Kernel 2: flash-style unscaled attention on (heads, bs, sl, d_k)
# ---------------------------------------------------------------------------
def _flash_kernel(q_ref, k_ref, v_ref, o_ref, m_sc, l_sc, acc_sc, *,
                  exp_dtype, approx_recip):
    kv = pl.program_id(3)

    @pl.when(kv == 0)
    def _():
        m_sc[...] = jnp.full(m_sc.shape, -jnp.inf, dtype=m_sc.dtype)
        l_sc[...] = jnp.zeros(l_sc.shape, dtype=l_sc.dtype)
        acc_sc[...] = jnp.zeros(acc_sc.shape, dtype=acc_sc.dtype)

    q = q_ref[...]                       # (tq, d_k)
    k = k_ref[...]                       # (tk, d_k)
    v = v_ref[...]                       # (tk, d_k)

    # Unscaled scores: contract d_k of both operands -> no per-head transpose.
    s = lax.dot_general(q, k, (((1,), (1,)), ((), ())),
                        preferred_element_type=jnp.float32)     # (tq, tk) f32

    m_prev = m_sc[...]
    m_new = jnp.maximum(m_prev, s.max(axis=-1, keepdims=True))
    alpha = jnp.exp(m_prev - m_new)
    # bf16 exp on v6e/v7x when d_k <= 64 (EUP-bound regime); f32 elsewhere.
    p = jnp.exp((s - m_new).astype(exp_dtype))
    # TODO(synk): dropout on attention probabilities omitted (eval/inference).
    l_sc[...] = alpha * l_sc[...] + p.sum(axis=-1, keepdims=True).astype(jnp.float32)
    acc_sc[...] = alpha * acc_sc[...] + jnp.dot(
        p.astype(v.dtype), v, preferred_element_type=jnp.float32)
    m_sc[...] = m_new

    @pl.when(kv == pl.num_programs(3) - 1)
    def _():
        if approx_recip:
            inv_l = pl.reciprocal(l_sc[...], approx=True)   # EUP slot, off the VPU path
            o_ref[...] = (acc_sc[...] * inv_l).astype(o_ref.dtype)
        else:
            o_ref[...] = (acc_sc[...] / l_sc[...]).astype(o_ref.dtype)


def _flash_attention(qh, kh, vh, out_dtype, tq, tk, exp_dtype, approx_recip,
                     vmem_limit):
    heads, bs, sl, d_k = qh.shape

    q_spec = pl.BlockSpec((pl.Squeezed(), pl.Squeezed(), tq, d_k),
                          lambda b, h, qi, ki: (h, b, qi, 0))
    kv_spec = pl.BlockSpec((pl.Squeezed(), pl.Squeezed(), tk, d_k),
                           lambda b, h, qi, ki: (h, b, ki, 0))
    o_spec = pl.BlockSpec((pl.Squeezed(), pl.Squeezed(), tq, d_k),
                          lambda b, h, qi, ki: (h, b, qi, 0))

    kernel = functools.partial(_flash_kernel, exp_dtype=exp_dtype,
                               approx_recip=approx_recip)
    # TODO(synk): for d_k < 128, pack 2 adjacent heads per grid step to make the
    # stored block lane-dense (>= 128 lanes).
    return pl.pallas_call(
        kernel,
        out_shape=jax.ShapeDtypeStruct((heads, bs, sl, d_k), out_dtype),
        grid_spec=pltpu.PrefetchScalarGridSpec(
            num_scalar_prefetch=0,
            grid=(bs, heads, sl // tq, sl // tk),
            in_specs=[q_spec, kv_spec, kv_spec],
            out_specs=o_spec,
            scratch_shapes=[
                pltpu.VMEM((tq, 1), jnp.float32),     # running max m
                pltpu.VMEM((tq, 1), jnp.float32),     # running denom l
                pltpu.VMEM((tq, d_k), jnp.float32),   # output accumulator
            ],
        ),
        compiler_params=pltpu.CompilerParams(
            dimension_semantics=("parallel", "parallel", "parallel", "arbitrary"),
            vmem_limit_bytes=vmem_limit),
    )(qh, kh, vh)


# ---------------------------------------------------------------------------
# Kernel 3: output projection, reducing over heads (no transpose of attn out)
#   out[r, :] = sum_h attn[h, r, :] @ Wo[h] + b
# ---------------------------------------------------------------------------
def _out_proj_kernel(x_ref, w_ref, b_ref, o_ref, acc_ref):
    h = pl.program_id(1)

    @pl.when(h == 0)
    def _():
        acc_ref[...] = jnp.zeros(acc_ref.shape, dtype=acc_ref.dtype)

    acc_ref[...] += jnp.dot(x_ref[...], w_ref[h],
                            preferred_element_type=jnp.float32)

    @pl.when(h == pl.num_programs(1) - 1)
    def _():
        o_ref[...] = (acc_ref[...] + b_ref[...]).astype(o_ref.dtype)


def _out_projection(attn_hm, w_hm, b, out_dtype, row_tile, vmem_limit):
    heads, rows, d_k = attn_hm.shape
    d_model = w_hm.shape[-1]
    return pl.pallas_call(
        _out_proj_kernel,
        out_shape=jax.ShapeDtypeStruct((rows, d_model), out_dtype),
        grid_spec=pltpu.PrefetchScalarGridSpec(
            num_scalar_prefetch=0,
            grid=(rows // row_tile, heads),
            in_specs=[
                pl.BlockSpec((pl.Squeezed(), row_tile, d_k),
                             lambda i, h: (h, i, 0)),
                _resident_spec((heads, d_k, d_model), lambda i, h: (0, 0, 0), w_hm),
                _resident_spec((1, d_model), lambda i, h: (0, 0), b),
            ],
            out_specs=pl.BlockSpec((row_tile, d_model), lambda i, h: (i, 0)),
            scratch_shapes=[pltpu.VMEM((row_tile, d_model), jnp.float32)],
        ),
        compiler_params=pltpu.CompilerParams(
            dimension_semantics=("parallel", "arbitrary"),
            vmem_limit_bytes=vmem_limit),
    )(attn_hm, w_hm, b)


# ---------------------------------------------------------------------------
# Module wrapper (eval-mode forward, mask=None)
# ---------------------------------------------------------------------------
def multi_head_attention_unscaled(q, k, v, params, *, heads,
                                  compute_dtype=jnp.bfloat16):
    """q, k, v: (bs, sl, d_model). params: PyTorch-style weights (W: (out, in))."""
    bs, sl, d_model = q.shape
    assert d_model % heads == 0
    d_k = d_model // heads
    compute_dtype = jnp.dtype(compute_dtype)
    is_bf16 = compute_dtype == jnp.dtype(jnp.bfloat16)

    prefs = _tile_prefs()
    vmem_limit = _vmem_limit_bytes()
    rows = bs * sl
    row_tile = _pick_tile(rows, prefs["rows"])
    tq = _pick_tile(sl, prefs["tq"])
    tk = _pick_tile(sl, prefs["tk"])
    exp_dtype = jnp.bfloat16 if (is_bf16 and prefs["bf16_exp"] and d_k <= 64) \
        else jnp.float32
    approx_recip = is_bf16  # exact division on the f32-strict path

    cast = lambda a: a.astype(compute_dtype)

    # PyTorch Linear stores W as (out, in).  One-time parameter-sized (D^2)
    # re-arrangement into head-major layouts the kernels consume directly:
    #   q/k/v weights: (heads, d_model_in, d_k)   out weight: (heads, d_k, d_model_out)
    def w_in(wa):
        return cast(jnp.transpose(wa.T.reshape(d_model, heads, d_k), (1, 0, 2)))

    def b_in(ba):
        return ba.reshape(heads, 1, d_k).astype(jnp.float32)

    wq, wk, wv = w_in(params["q_w"]), w_in(params["k_w"]), w_in(params["v_w"])
    bq, bk, bv = b_in(params["q_b"]), b_in(params["k_b"]), b_in(params["v_b"])
    wo = cast(params["out_w"].T.reshape(heads, d_k, d_model))
    bo = params["out_b"].reshape(1, d_model).astype(jnp.float32)

    q2d = cast(q).reshape(rows, d_model)
    k2d = cast(k).reshape(rows, d_model)
    v2d = cast(v).reshape(rows, d_model)

    # Q/K/V projections emit head-major (heads, rows, d_k) directly — no
    # wrapper-side head-split transposes, single HBM pass per tensor.
    # TODO(synk): when q is k is v (self-attention) these three calls could be
    # fused into one GEMM over a stacked (3, heads, d_model, d_k) weight.
    qp = _head_projection(q2d, wq, bq, compute_dtype, row_tile, vmem_limit)
    kp = _head_projection(k2d, wk, bk, compute_dtype, row_tile, vmem_limit)
    vp = _head_projection(v2d, wv, bv, compute_dtype, row_tile, vmem_limit)

    # Free contiguous reshapes (metadata only): (heads, rows, d_k) <-> (heads, bs, sl, d_k).
    shape4 = (heads, bs, sl, d_k)
    attn = _flash_attention(qp.reshape(shape4), kp.reshape(shape4),
                            vp.reshape(shape4), compute_dtype, tq, tk,
                            exp_dtype, approx_recip, vmem_limit)
    attn = attn.reshape(heads, rows, d_k)

    # Output projection reduces over heads in-kernel ("arbitrary" accumulator
    # axis), consuming the head-major attention output without any transpose.
    out = _out_projection(attn, wo, bo, q.dtype, row_tile, vmem_limit)
    return out.reshape(bs, sl, d_model)


# ---------------------------------------------------------------------------
# Pure-JAX reference (mirrors the PyTorch forward, eval mode, mask=None)
# ---------------------------------------------------------------------------
def _reference(q, k, v, params, *, heads):
    bs, sl, d_model = q.shape
    d_k = d_model // heads

    def lin(x, w, b):
        return jnp.einsum("bsd,od->bso", x, w) + b

    qp = lin(q, params["q_w"], params["q_b"]).reshape(bs, sl, heads, d_k).transpose(0, 2, 1, 3)
    kp = lin(k, params["k_w"], params["k_b"]).reshape(bs, sl, heads, d_k).transpose(0, 2, 1, 3)
    vp = lin(v, params["v_w"], params["v_b"]).reshape(bs, sl, heads, d_k).transpose(0, 2, 1, 3)

    scores = jnp.einsum("bhqd,bhkd->bhqk", qp, kp)           # unscaled
    scores = jax.nn.softmax(scores, axis=-1)
    out = jnp.einsum("bhqk,bhkd->bhqd", scores, vp)
    concat = out.transpose(0, 2, 1, 3).reshape(bs, sl, d_model)
    return jnp.einsum("bsd,od->bso", concat, params["out_w"]) + params["out_b"]


if __name__ == "__main__":
    bs, sl, d_model, heads = 2, 8, 32, 4

    key = jax.random.PRNGKey(0)
    keys = jax.random.split(key, 12)

    def winit(kk):
        return jax.random.normal(kk, (d_model, d_model), jnp.float32) * 0.1

    def binit(kk):
        return jax.random.normal(kk, (d_model,), jnp.float32) * 0.1

    params = {
        "q_w": winit(keys[0]), "q_b": binit(keys[1]),
        "k_w": winit(keys[2]), "k_b": binit(keys[3]),
        "v_w": winit(keys[4]), "v_b": binit(keys[5]),
        "out_w": winit(keys[6]), "out_b": binit(keys[7]),
    }

    q = jax.random.normal(keys[8], (bs, sl, d_model), jnp.float32)
    k = jax.random.normal(keys[9], (bs, sl, d_model), jnp.float32)
    v = jax.random.normal(keys[10], (bs, sl, d_model), jnp.float32)

    ref = _reference(q, k, v, params, heads=heads)

    # f32 compute path (tight check: exact softmax division, f32 exp).
    out_f32 = multi_head_attention_unscaled(q, k, v, params, heads=heads,
                                            compute_dtype=jnp.float32)
    out_f32 = jax.block_until_ready(out_f32)
    assert out_f32.shape == (bs, sl, d_model)
    assert jnp.allclose(out_f32, ref, atol=5e-3, rtol=5e-3), "f32 mismatch vs reference"

    # bf16 MXU-input path (default; f32 accumulation), looser tolerance.
    out_bf16 = multi_head_attention_unscaled(q, k, v, params, heads=heads)
    out_bf16 = jax.block_until_ready(out_bf16)
    assert out_bf16.shape == (bs, sl, d_model)
    assert jnp.allclose(out_bf16, ref, atol=3e-2, rtol=3e-2), "bf16 mismatch vs reference"

    print("KERNEL_OK")
</pallas_src>

<mosaic_0001>
module attributes {stable_mosaic.version = 11 : i64} {
  func.func @_head_proj_kernel(%arg0: i32, %arg1: i32, %arg2: memref<16x32xf32, #tpu.memory_space<vmem>>, %arg3: memref<4x32x8xf32, #tpu.memory_space<vmem>>, %arg4: memref<4x1x8xf32, #tpu.memory_space<vmem>>, %arg5: memref<1x16x8xf32, #tpu.memory_space<vmem>>) attributes {dimension_semantics = [#tpu.dimension_semantics<parallel>, #tpu.dimension_semantics<parallel>], iteration_bounds = array<i64: 1, 4>, scalar_prefetch = 0 : i64, scratch_operands = 0 : i64, tpu.core_type = #tpu.core_type<tc>, window_params = [{transform_indices = @transform_0, window_bounds = array<i64: 16, 32>}, {pipeline_mode = #tpu.pipeline_mode<synchronous>, transform_indices = @transform_1, window_bounds = array<i64: 4, 32, 8>}, {pipeline_mode = #tpu.pipeline_mode<synchronous>, transform_indices = @transform_2, window_bounds = array<i64: 4, 1, 8>}, {transform_indices = @transform_3, window_bounds = array<i64: 1, 16, 8>}]} {
    %c0 = arith.constant 0 : index
    %c0_0 = arith.constant 0 : index
    %0 = vector.load %arg2[%c0, %c0_0] : memref<16x32xf32, #tpu.memory_space<vmem>>, vector<16x32xf32>
    %1 = arith.index_cast %arg1 : i32 to index
    %c0_1 = arith.constant 0 : index
    %c0_2 = arith.constant 0 : index
    %2 = vector.load %arg3[%1, %c0_1, %c0_2] : memref<4x32x8xf32, #tpu.memory_space<vmem>>, vector<1x32x8xf32>
    %3 = vector.shape_cast %2 : vector<1x32x8xf32> to vector<32x8xf32>
    %cst = arith.constant dense<0.000000e+00> : vector<16x8xf32>
    %4 = tpu.matmul %0, %3, %cst {dimension_numbers = #tpu.dot_dimension_numbers<[1], [0], [0], [1], [0, 0, 1, 1], [], []>} : vector<16x32xf32>, vector<32x8xf32>, vector<16x8xf32> -> vector<16x8xf32>
    %5 = arith.index_cast %arg1 : i32 to index
    %c0_3 = arith.constant 0 : index
    %c0_4 = arith.constant 0 : index
    %6 = vector.load %arg4[%5, %c0_3, %c0_4] : memref<4x1x8xf32, #tpu.memory_space<vmem>>, vector<1x1x8xf32>
    %7 = vector.shape_cast %6 : vector<1x1x8xf32> to vector<1x8xf32>
    %8 = vector.broadcast %7 : vector<1x8xf32> to vector<16x8xf32>
    %9 = arith.addf %4, %8 : vector<16x8xf32>
    %c0_5 = arith.constant 0 : index
    %c0_6 = arith.constant 0 : index
    %c0_7 = arith.constant 0 : index
    %10 = vector.load %arg5[%c0_5, %c0_6, %c0_7] : memref<1x16x8xf32, #tpu.memory_space<vmem>>, vector<1x16x8xf32>
    %11 = vector.shape_cast %10 : vector<1x16x8xf32> to vector<16x8xf32>
    %12 = vector.shape_cast %9 : vector<16x8xf32> to vector<1x16x8xf32>
    tpu.vector_store %arg5[%c0_5, %c0_6, %c0_7], %12 {strides = array<i32>} : memref<1x16x8xf32, #tpu.memory_space<vmem>>, vector<1x16x8xf32>,
    return
  }
  func.func @transform_0(%arg0: i32, %arg1: i32) -> (i32, i32) {
    %c0_i32 = arith.constant 0 : i32
    %c0_i32_0 = arith.constant 0 : i32
    return %arg0, %c0_i32 : i32, i32
  }
  func.func @transform_1(%arg0: i32, %arg1: i32) -> (i32, i32, i32) {
    %c0_i32 = arith.constant 0 : i32
    %c0_i32_0 = arith.constant 0 : i32
    %c0_i32_1 = arith.constant 0 : i32
    %c0_i32_2 = arith.constant 0 : i32
    return %c0_i32, %c0_i32_0, %c0_i32_1 : i32, i32, i32
  }
  func.func @transform_2(%arg0: i32, %arg1: i32) -> (i32, i32, i32) {
    %c0_i32 = arith.constant 0 : i32
    %c0_i32_0 = arith.constant 0 : i32
    %c0_i32_1 = arith.constant 0 : i32
    %c0_i32_2 = arith.constant 0 : i32
    return %c0_i32, %c0_i32_0, %c0_i32_1 : i32, i32, i32
  }
  func.func @transform_3(%arg0: i32, %arg1: i32) -> (i32, i32, i32) {
    %c0_i32 = arith.constant 0 : i32
    %c0_i32_0 = arith.constant 0 : i32
    return %arg1, %arg0, %c0_i32 : i32, i32, i32
  }
}

</mosaic_0001>

<llo_original>
// kernel: tpu_custom_call.1
$region0: #{tpu_custom_call.1}
  #allocation0 [shape = 'u32[]', space=smem, size = 0x4, offset = 0x4, fixed_abs, tag = 'smem constant byte address 0x4 - core index']
  #allocation1 [shape = 'u32[144,128]{1,0:T(1,128)}', space=vmem, size = 0x12000, scoped, tag = 'internal scratch']
  %s0 = inlined_call_operand.hbm [shape: f32[16,32], index: 0, kind: input, shape index: {}]
  %s1 = inlined_call_operand.hbm [shape: f32[4,32,8], index: 1, kind: input, shape index: {}]
  %s2 = inlined_call_operand.hbm [shape: f32[4,1,8], index: 2, kind: input, shape index: {}]
  %s3 = inlined_call_operand.hbm [shape: f32[4,16,8], index: 3, kind: output, shape index: {}]
  %s4 = sld [smem:[#allocation0]]
  $region57: #{tpu_custom_call.1} parent=0
    _
  %s6 = ssub.s32 1, %s4
  %s7 = scalar_select 0, %s6, %s4
  $region1: #{tpu_custom_call.1} parent=0
    #allocation2 [shape = 'u8[8192]{0}', space=vmem, size = 0x2000, scoped, tag = 'input window, operand 0, single buffered']
    #allocation3 [shape = 's32[2]{0}', space=sflag, size = 0x8, scoped, tag = 'scoped memory for tpu_custom_call.1']
    #allocation4 [shape = 's32[2]{0}', space=sflag, size = 0x8, scoped, tag = 'scoped memory for tpu_custom_call.1']
    #allocation5 [shape = 'u8[65536]{0}', space=vmem, size = 0x10000, scoped, tag = 'input window, operand 1, single buffered']
    #allocation6 [shape = 's32[1]{0}', space=sflag, size = 0x4, scoped, tag = 'scoped memory for tpu_custom_call.1']
    #allocation7 [shape = 'u8[2048]{0}', space=vmem, size = 0x800, scoped, tag = 'input window, operand 2, single buffered']
    #allocation8 [shape = 'u8[16384]{0}', space=vmem, size = 0x4000, scoped, tag = 'output window, operand 0']
    %8 = vsyncpa [#allocation3], 0
    %9 = vsyncpa [#allocation6], 0
    %10 = vsyncpa [#allocation4], 0
    %s11 = scalar_lea.sflag [#allocation4], 1
    %12 = vsyncpa %s11, 0
    loop: start=0, step=1, limit=6
    $region2: #{tpu_custom_call.1} parent=1 // loop_pre_header
      _
    $region3: #{tpu_custom_call.1} parent=1 // loop_header
      %s14 = sphi 0, %s18
      %p15 = scmp.ge.s32.totalorder %s14, 6
      %s21 = sphi 0, %s33
      %s22 = sphi 0, %s29
      %s23 = sphi 0, %s21
      %s24 = sphi 0, %s22
      %s25 = sphi 0, %s23
      %s26 = sphi 0, %s24
      %s36 = sphi 0, %s38
      %s39 = sphi 0, %s36
      %s40 = sphi 0, %s39
      %s56 = sphi 0, %s40
      %s60 = sphi 0, %s60
      %s62 = sphi 0, %s60
      %s63 = sphi 0, %s62
      %s77 = sphi 0, %s63
      %s81 = sphi 0, %s81
      %s83 = sphi 0, %s81
      %s84 = sphi 0, %s83
      %s98 = sphi 0, %s84
      %s106 = sphi 0, %s108
      %s109 = sphi 0, %s106
      %s110 = sphi 0, %s109
      %s126 = sphi 0, %s110
    $region4: #{tpu_custom_call.1} parent=1 // loop_header_branch
      %17 = sbr.rel (%p15) target = $region8
    $region5: #{tpu_custom_call.1} parent=1 // loop_body
      %s19 = ssub.s32 %s14, 1
      %s20 = ssub.s32 %s14, 2
      %s27 = sadd.s32 1, %s22
      %p28 = scmp.ge.s32.totalorder %s27, 4
      %s29 = scalar_select %p28, 0, %s27
      %s30 = sadd.s32 1, %s21
      %s31 = scalar_select %p28, %s30, %s21
      %p32 = scmp.ge.s32.totalorder %s31, 1
      %s33 = scalar_select %p32, 0, %s31
      %s34 = ssub.s32 %s21, %s33
      %p35 = scmp.eq.s32.totalorder %s34, 0
      %s37 = sadd.s32 %s36, 1
      %s38 = scalar_select %p35, %s36, %s37
      %p41 = pneg %p35
      %p42 = scmp.eq.s32.totalorder %s14, 3
      %p43 = por %p41, %p42
      %p44 = scmp.ne.s32.totalorder %s36, %s39
      %p45 = scmp.eq.s32.totalorder %s14, 0
      %p46 = por %p44, %p45
      %p47 = scmp.ne.s32.totalorder %s36, %s39
      %p48 = scmp.eq.s32.totalorder %s19, 3
      %p49 = por %p47, %p48
      %p50 = scmp.ne.s32.totalorder %s39, %s40
      %p51 = scmp.eq.s32.totalorder %s19, 0
      %p52 = por %p50, %p51
      %p53 = scmp.ne.s32.totalorder %s39, %s40
      %p54 = scmp.eq.s32.totalorder %s20, 3
      %p55 = por %p53, %p54
      %p57 = scmp.ne.s32.totalorder %s40, %s56
      %p58 = scmp.eq.s32.totalorder %s20, 0
      %p59 = por %p57, %p58
      %s61 = sadd.s32 %s60, 1
      %p64 = scmp.eq.s32.totalorder %s14, 3
      %p65 = scmp.ne.s32.totalorder %s60, %s62
      %p66 = scmp.eq.s32.totalorder %s14, 0
      %p67 = por %p65, %p66
      %p68 = scmp.ne.s32.totalorder %s60, %s62
      %p69 = scmp.eq.s32.totalorder %s19, 3
      %p70 = por %p68, %p69
      %p71 = scmp.ne.s32.totalorder %s62, %s63
      %p72 = scmp.eq.s32.totalorder %s19, 0
      %p73 = por %p71, %p72
      %p74 = scmp.ne.s32.totalorder %s62, %s63
      %p75 = scmp.eq.s32.totalorder %s20, 3
      %p76 = por %p74, %p75
      %p78 = scmp.ne.s32.totalorder %s63, %s77
      %p79 = scmp.eq.s32.totalorder %s20, 0
      %p80 = por %p78, %p79
      %s82 = sadd.s32 %s81, 1
      %p85 = scmp.eq.s32.totalorder %s14, 3
      %p86 = scmp.ne.s32.totalorder %s81, %s83
      %p87 = scmp.eq.s32.totalorder %s14, 0
      %p88 = por %p86, %p87
      %p89 = scmp.ne.s32.totalorder %s81, %s83
      %p90 = scmp.eq.s32.totalorder %s19, 3
      %p91 = por %p89, %p90
      %p92 = scmp.ne.s32.totalorder %s83, %s84
      %p93 = scmp.eq.s32.totalorder %s19, 0
      %p94 = por %p92, %p93
      %p95 = scmp.ne.s32.totalorder %s83, %s84
      %p96 = scmp.eq.s32.totalorder %s20, 3
      %p97 = por %p95, %p96
      %p99 = scmp.ne.s32.totalorder %s84, %s98
      %p100 = scmp.eq.s32.totalorder %s20, 0
      %p101 = por %p99, %p100
      %s102 = ssub.s32 %s22, %s29
      %s103 = ssub.s32 %s21, %s33
      %s104 = sor.u32 %s102, %s103
      %p105 = scmp.eq.s32.totalorder %s104, 0
      %s107 = sadd.s32 %s106, 1
      %s108 = scalar_select %p105, %s106, %s107
      %p111 = pneg %p105
      %p112 = scmp.eq.s32.totalorder %s14, 3
      %p113 = por %p111, %p112
      %p114 = scmp.ne.s32.totalorder %s106, %s109
      %p115 = scmp.eq.s32.totalorder %s14, 0
      %p116 = por %p114, %p115
      %p117 = scmp.ne.s32.totalorder %s106, %s109
      %p118 = scmp.eq.s32.totalorder %s19, 3
      %p119 = por %p117, %p118
      %p120 = scmp.ne.s32.totalorder %s109, %s110
      %p121 = scmp.eq.s32.totalorder %s19, 0
      %p122 = por %p120, %p121
      %p123 = scmp.ne.s32.totalorder %s109, %s110
      %p124 = scmp.eq.s32.totalorder %s20, 3
      %p125 = por %p123, %p124
      %p127 = scmp.ne.s32.totalorder %s110, %s126
      %p128 = scmp.eq.s32.totalorder %s20, 0
      %p129 = por %p127, %p128
      %p130 = scmp.le.s32.totalorder 1, %s14
      %p131 = scmp.lt.s32.totalorder %s14, 5
      %p132 = pnand %p130, %p131
      %p133 = pneg %p132
      // Predicated region
      $region9: #{tpu_custom_call.1} parent=5 // pred_check
        _
      $region10: #{tpu_custom_call.1} parent=5 // pred_check_branch
        %135 = sbr.rel (%p132) target = $region12
      $region11: #{tpu_custom_call.1} parent=5 // pred_region
        %s136 = ssub.s32 %s14, 1
        // Predicated region
        $region13: #{tpu_custom_call.1} parent=11 // pred_check
          %p137 = pneg %p52
        $region14: #{tpu_custom_call.1} parent=11 // pred_check_branch
          %139 = sbr.rel (%p137) target = $region16
        $region15: #{tpu_custom_call.1} parent=11 // pred_region
          %s140 = smul.u32 2, %s23
          %s142 = ssub.s32 256, 256
          %143 = vsyncadd [#allocation3], %s142
          %s144 = smul.addr %s140, 128
          %s145 = scalar_lea.hbm %s0, %s144
          %s146 = sshll.u32 [#allocation2], 4
          %s147 = int_to_ptr.vmem [resolvable:$true] %s146
          %152 = dma.hbm_to_vmem [thread:$0]  %s145, 256, %s147, [#allocation3], 128, 128, 8
        $region16: #{tpu_custom_call.1} parent=11 // pred_fallthru
          _
        // Predicated region
        $region17: #{tpu_custom_call.1} parent=11 // pred_check
          %p153 = pneg %p73
        $region18: #{tpu_custom_call.1} parent=11 // pred_check_branch
          %155 = sbr.rel (%p153) target = $region20
        $region19: #{tpu_custom_call.1} parent=11 // pred_region
          %s157 = ssub.s32 2048, 2048
          %158 = vsyncadd [#allocation6], %s157
          %s159 = sshll.u32 [#allocation5], 4
          %s160 = int_to_ptr.vmem [resolvable:$true] %s159
          %165 = dma.hbm_to_vmem [thread:$0]  %s1, 2048, %s160, [#allocation6], 128, 128, 8
        $region20: #{tpu_custom_call.1} parent=11 // pred_fallthru
          _
        // Predicated region
        $region21: #{tpu_custom_call.1} parent=11 // pred_check
          %p166 = pneg %p94
        $region22: #{tpu_custom_call.1} parent=11 // pred_check_branch
          %168 = sbr.rel (%p166) target = $region24
        $region23: #{tpu_custom_call.1} parent=11 // pred_region
          %s170 = ssub.s32 64, 64
          %171 = vsyncadd [#allocation6], %s170
          %s172 = sshll.u32 [#allocation7], 4
          %s173 = int_to_ptr.vmem [resolvable:$true] %s172
          %178 = dma.hbm_to_vmem [thread:$0]  %s2, 64, %s173, [#allocation6], 16, 16, 1
        $region24: #{tpu_custom_call.1} parent=11 // pred_fallthru
          _
      $region12: #{tpu_custom_call.1} parent=5 // pred_fallthru
        _
      %p179 = scmp.lt.s32.totalorder %s14, 4
      // Predicated region
      $region25: #{tpu_custom_call.1} parent=5 // pred_check
        %p180 = pneg %p179
      $region26: #{tpu_custom_call.1} parent=5 // pred_check_branch
        %182 = sbr.rel (%p180) target = $region28
      $region27: #{tpu_custom_call.1} parent=5 // pred_region
        _
      $region28: #{tpu_custom_call.1} parent=5 // pred_fallthru
        _
      %p183 = scmp.le.s32.totalorder 1, %s14
      %p184 = scmp.lt.s32.totalorder %s14, 5
      %p185 = pnand %p183, %p184
      %p186 = pneg %p185
      // Predicated region
      $region29: #{tpu_custom_call.1} parent=5 // pred_check
        _
      $region30: #{tpu_custom_call.1} parent=5 // pred_check_branch
        %188 = sbr.rel (%p185) target = $region32
      $region31: #{tpu_custom_call.1} parent=5 // pred_region
        %s189 = ssub.s32 %s14, 1
        // Predicated region
        $region33: #{tpu_custom_call.1} parent=31 // pred_check
          %p190 = pneg %p52
        $region34: #{tpu_custom_call.1} parent=31 // pred_check_branch
          %192 = sbr.rel (%p190) target = $region36
        $region35: #{tpu_custom_call.1} parent=31 // pred_region
          %193 = dma.done [#allocation3], 256
        $region36: #{tpu_custom_call.1} parent=31 // pred_fallthru
          _
        // Predicated region
        $region37: #{tpu_custom_call.1} parent=31 // pred_check
          %p194 = pneg %p73
        $region38: #{tpu_custom_call.1} parent=31 // pred_check_branch
          %196 = sbr.rel (%p194) target = $region40
        $region39: #{tpu_custom_call.1} parent=31 // pred_region
          %197 = dma.done [#allocation6], 2048
        $region40: #{tpu_custom_call.1} parent=31 // pred_fallthru
          _
        // Predicated region
        $region41: #{tpu_custom_call.1} parent=31 // pred_check
          %p198 = pneg %p94
        $region42: #{tpu_custom_call.1} parent=31 // pred_check_branch
          %200 = sbr.rel (%p198) target = $region44
        $region43: #{tpu_custom_call.1} parent=31 // pred_region
          %201 = dma.done [#allocation6], 64
        $region44: #{tpu_custom_call.1} parent=31 // pred_fallthru
          _
        %p202 = pneg %p52
        %p203 = pneg %p49
        %p204 = pneg %p73
        %p205 = pneg %p70
        %p206 = pneg %p94
        %p207 = pneg %p91
        %p208 = pneg %p122
        %p209 = pneg %p119
        %s210 = sand.u32 %s109, 1
        %s211 = scalar_lea.sflag [#allocation4], %s210
        %s212 = sand.u32 %s109, 1
        %s213 = smul.addr %s212, 16
        %s214 = scalar_lea.vmem [#allocation8], %s213
        %s215 = smul.u32 2, %s23
        %s216 = smul.u32 2, %s23
        %v217 = vld [vmem:[#allocation2] sm:$0xff]
        %v218 = vld [vmem:[#allocation2 + $0x8] sm:$0xff]
        %s219 = smul.u32 %s24, 32
        %s220 = scalar_lea.vmem [#allocation5], %s219
        %v221 = vld [vmem:[%s220] sm:$0xff]
        %v222 = vld [vmem:[%s220 + $0x8] sm:$0xff]
        %v223 = vld [vmem:[%s220 + $0x10] sm:$0xff]
        %v224 = vld [vmem:[%s220 + $0x18] sm:$0xff]
        %s225 = scalar_lea.vmem [#allocation7], %s24
        %v226 = vld [vmem:[%s225] sm:$0x1]
        %v228 = vlaneseq
        %v229 = vshrl.u32 %v228, 7
        %v230 = vsub.s32 0, %v229
        %v231 = vrot.slane %v226, %v230
        %vm233 = vcmask 261120
        %v235 = vsel %vm233, %v217, 0
        %v238 = vsel %vm233, %v218, 0
        %240 = vmatprep.subr.mxu0 0.0
        %241 = vmatpush1.msra.mxu0 %v221
        %242 = vmatprep.subr.mxu0 0.0
        %243 = vmatpush1.msra.mxu0 %v222
        %244 = vmatprep.subr.mxu0 0.0
        %245 = vmatpush1.msra.mxu0 %v223
        %246 = vmatprep.subr.mxu0 0.0
        %247 = vmatpush1.msra.mxu0 %v224
        %248 = vmatprep.subr.mxu0 0.0
        %249 = vmatpush1.msra.mxu0 0.0
        %250 = vmatprep.subr.mxu0 0.0
        %251 = vmatpush1.msra.mxu0 0.0
        %252 = vmatprep.subr.mxu0 0.0
        %253 = vmatpush1.msra.mxu0 0.0
        %254 = vmatprep.subr.mxu0 0.0
        %255 = vmatpush1.msra.mxu0 0.0
        %256 = vmatprep.subr.mxu0 0.0
        %257 = vmatpush1.msra.mxu0 0.0
        %258 = vmatprep.subr.mxu0 0.0
        %259 = vmatpush1.msra.mxu0 0.0
        %260 = vmatprep.subr.mxu0 0.0
        %261 = vmatpush1.msra.mxu0 0.0
        %262 = vmatprep.subr.mxu0 0.0
        %263 = vmatpush1.msra.mxu0 0.0
        %264 = vmatprep.subr.mxu0 0.0
        %265 = vmatpush1.msra.mxu0 0.0
        %266 = vmatprep.subr.mxu0 0.0
        %267 = vmatpush1.msra.mxu0 0.0
        %268 = vmatprep.subr.mxu0 0.0
        %269 = vmatpush1.msra.mxu0 0.0
        %270 = vmatprep.subr.mxu0 0.0
        %271 = vmatpush1.msra.mxu0 0.0
        %272 = vmatprep.subr.mxu0 0.0
        %273 = vmatpush1.msra.mxu0 0.0
        %274 = vmatprep.subr.mxu0 0.0
        %275 = vmatpush1.msra.mxu0 0.0
        %276 = vmatprep.subr.mxu0 0.0
        %277 = vmatpush1.msra.mxu0 0.0
        %278 = vmatprep.subr.mxu0 0.0
        %279 = vmatpush1.msra.mxu0 0.0
        %280 = vmatprep.subr.mxu0 0.0
        %281 = vmatpush1.msra.mxu0 0.0
        %282 = vmatprep.subr.mxu0 0.0
        %283 = vmatpush1.msra.mxu0 0.0
        %284 = vmatprep.subr.mxu0 0.0
        %285 = vmatpush1.msra.mxu0 0.0
        %286 = vmatprep.subr.mxu0 0.0
        %287 = vmatpush1.msra.mxu0 0.0
        %288 = vmatprep.subr.mxu0 0.0
        %289 = vmatpush1.msra.mxu0 0.0
        %290 = vmatprep.subr.mxu0 0.0
        %291 = vmatpush1.msra.mxu0 0.0
        %292 = vmatprep.subr.mxu0 0.0
        %293 = vmatpush1.msra.mxu0 0.0
        %294 = vmatprep.subr.mxu0 0.0
        %295 = vmatpush1.msra.mxu0 0.0
        %296 = vmatprep.subr.mxu0 0.0
        %297 = vmatpush1.msra.mxu0 0.0
        %298 = vmatprep.subr.mxu0 0.0
        %299 = vmatpush1.msra.mxu0 0.0
        %300 = vmatprep.subr.mxu0 0.0
        %301 = vmatpush1.msra.mxu0 0.0
        %302 = vmatprep.subr.mxu0 0.0
        %303 = vmatpush1.msra.mxu0 0.0
        %304 = vmatprep.mubr.f32.mxu0 0.0
        %305 = vmatmul.mubr.f32.gmra.mrb[0].mxu0 %v235
        %v306 = vpop.f32.mrb[0].mxu0
        %v307 = vadd.f32 %v231, %v306
        %v308 = vpop.f32.mrb[0].mxu0
        %309 = vmatprep.mubr.f32.mxu0 0.0
        %310 = vmatmul.mubr.f32.gmra.mrb[0].mxu0 %v238
        %v311 = vpop.f32.mrb[0].mxu0
        %v312 = vadd.f32 %v231, %v311
        %v313 = vpop.f32.mrb[0].mxu0
        %314 = vdwg.mxu0
        %vm315 = vcmask 64512
        %316 = vst.msk [vmem:[%s214] sm:$0xff] %vm315, %v307
        %317 = vst.msk [vmem:[%s214 + $0x8] sm:$0xff] %vm315, %v312
        %s318 = sand.u32 %s109, 1
        %s319 = scalar_lea.sflag [#allocation4], %s318
        %s320 = sand.u32 %s109, 1
        %s321 = smul.addr %s320, 16
        %s322 = scalar_lea.vmem [#allocation8], %s321
        // Predicated region
        $region45: #{tpu_custom_call.1} parent=31 // pred_check
          %p323 = pneg %p119
        $region46: #{tpu_custom_call.1} parent=31 // pred_check_branch
          %325 = sbr.rel (%p323) target = $region48
        $region47: #{tpu_custom_call.1} parent=31 // pred_region
          %s326 = smul.u32 2, %s23
          %s328 = ssub.s32 256, 256
          %329 = vsyncadd %s319, %s328
          %s330 = smul.addr %s24, 2
          %s331 = sadd.s32 %s326, %s330
          %s332 = smul.addr %s331, 128
          %s333 = scalar_lea.hbm %s3, %s332
          %s334 = sshll.u32 %s322, 4
          %s335 = int_to_ptr.vmem [resolvable:$true] %s334
          %340 = dma.vmem_to_hbm [thread:$0]  %s335, 256, %s333, %s319, 128, 128, 8
        $region48: #{tpu_custom_call.1} parent=31 // pred_fallthru
          _
      $region32: #{tpu_custom_call.1} parent=5 // pred_fallthru
        _
      %p341 = scmp.le.s32.totalorder 2, %s14
      // Predicated region
      $region49: #{tpu_custom_call.1} parent=5 // pred_check
        %p342 = pneg %p341
      $region50: #{tpu_custom_call.1} parent=5 // pred_check_branch
        %344 = sbr.rel (%p342) target = $region52
      $region51: #{tpu_custom_call.1} parent=5 // pred_region
        %s345 = ssub.s32 %s14, 2
        // Predicated region
        $region53: #{tpu_custom_call.1} parent=51 // pred_check
          %p346 = pneg %p125
        $region54: #{tpu_custom_call.1} parent=51 // pred_check_branch
          %348 = sbr.rel (%p346) target = $region56
        $region55: #{tpu_custom_call.1} parent=51 // pred_region
          %s349 = sand.u32 %s110, 1
          %s350 = scalar_lea.sflag [#allocation4], %s349
          %s351 = sand.u32 %s110, 1
          %s352 = smul.addr %s351, 16
          %s353 = scalar_lea.vmem [#allocation8], %s352
          %354 = dma.done %s350, 256
        $region56: #{tpu_custom_call.1} parent=51 // pred_fallthru
          _
      $region52: #{tpu_custom_call.1} parent=5 // pred_fallthru
        _
    $region6: #{tpu_custom_call.1} parent=1 // loop_footer
      %s18 = sadd.s32 1, %s14
    $region7: #{tpu_custom_call.1} parent=1 // loop_footer_branch
      %13 = sbr.rel target = $region3
    $region8: #{tpu_custom_call.1} parent=1 // loop_exit
      _
    %355 = vsyncpa [#allocation3], 1
    %s356 = scalar_lea.sflag [#allocation3], 1
    %357 = vsyncpa %s356, 1
    %358 = vsyncpa [#allocation6], 1
    %359 = vsyncpa [#allocation4], 1
    %s360 = scalar_lea.sflag [#allocation4], 1
    %361 = vsyncpa %s360, 1

</llo_original>
